<compile_context>
chip_gen: v7x
topology: tpu7x:2x2x1
jax: 0.10.0
libtpu: 0.0.40
codegen_flags: <defaults>
</compile_context>

<pallas_src>
import functools

import jax
import jax.numpy as jnp
from jax import lax
from jax.experimental import pallas as pl
from jax.experimental.pallas import tpu as pltpu


def _normalize_kernel(x_ref, o_ref, *, power):
    # x tile: [bn, D]; reduction over the last (lane) axis == torch dim 1.
    x = x_ref[...]                          # native dtype
    xf = x.astype(jnp.float32)              # f32 only for the reduction

    if power == 2.0:
        # L2: sum of squares + rsqrt (single EUP op per row).
        ss = jnp.sum(xf * xf, axis=-1, keepdims=True)       # [bn, 1]
        inv_norm = lax.rsqrt(ss)
    elif float(power).is_integer() and power > 0:
        # Small integer p: repeated multiplies on the VPU (no per-element
        # exp/log on the single EUP slot).  Per-row pow(1/p) is cheap.
        p = int(power)
        s = jnp.sum(lax.integer_pow(xf, p), axis=-1, keepdims=True)
        norm = jnp.power(s, 1.0 / p)                         # per-row only
        inv_norm = pl.reciprocal(norm, approx=True)
    else:
        # Truly non-integer p: keep the reference expression verbatim.
        s = jnp.sum(jnp.power(xf, power), axis=-1, keepdims=True)
        norm = jnp.power(s, 1.0 / power)
        inv_norm = pl.reciprocal(norm, approx=True)

    # Multiply in the input dtype (per-row broadcast); avoids keeping a full
    # f32 upcast of the tile live for the store when x is bf16/int8.
    o_ref[...] = (x * inv_norm.astype(x.dtype)).astype(o_ref.dtype)


def _sublane_pack(dtype) -> int:
    # Rows per packed sublane group: 8 for 4-byte, 16 for 2-byte, 32 for 1-byte.
    return max(8, 32 // jnp.dtype(dtype).itemsize)


def _vmem_limit_bytes() -> int:
    # ~75% of physical per-TC VMEM, capped at 96 MiB.
    #   v7x : 64 MiB physical -> 48 MiB budget
    #   v5e / v6e : 128 MiB physical -> 96 MiB budget
    try:
        cap = pltpu.get_tpu_info().vmem_capacity_bytes
        return int(min(cap * 3 // 4, 96 << 20))
    except Exception:
        return 32 << 20


def normalize(x, *, power=2, target_tile_bytes=4 << 20):
    """Pallas forward of Normalize(power) for a 2-D input [N, D] (dim=1 norm)."""
    N, D = x.shape
    itemsize = jnp.dtype(x.dtype).itemsize
    pack = _sublane_pack(x.dtype)
    vmem_limit = _vmem_limit_bytes()

    if N <= pack:
        # Tiny problem: single full-array block (block dims == array dims).
        bn = N
    else:
        # Rows giving ~target_tile_bytes per tile, rounded down to the pack.
        rows_for_target = max(pack, (target_tile_bytes // (D * itemsize)) // pack * pack)
        # Keep the grid >= 2 steps so v7x's two TensorCores both get work.
        half_n = max(pack, (N // 2) // pack * pack)
        bn = int(min(rows_for_target, half_n))
        # Shrink if double-buffered in+out tiles (+4 MiB slack) would not fit.
        while bn > pack and 4 * bn * D * itemsize + (4 << 20) > vmem_limit:
            bn = max(pack, (bn // 2) // pack * pack)

    grid = (pl.cdiv(N, bn),)

    kernel = functools.partial(_normalize_kernel, power=float(power))

    cost = pl.CostEstimate(
        flops=3 * N * D,              # square + reduce-add + scale
        transcendentals=N,            # one rsqrt / reciprocal per row
        bytes_accessed=2 * N * D * itemsize,
    )

    return pl.pallas_call(
        kernel,
        out_shape=jax.ShapeDtypeStruct((N, D), x.dtype),
        grid=grid,
        in_specs=[pl.BlockSpec((bn, D), lambda i: (i, 0))],
        out_specs=pl.BlockSpec((bn, D), lambda i: (i, 0)),
        compiler_params=pltpu.CompilerParams(
            dimension_semantics=("parallel",),   # shards row tiles across TCs on v7x
            vmem_limit_bytes=vmem_limit,
        ),
        cost_estimate=cost,
    )(x)


if __name__ == "__main__":
    # Small shapes consistent with the module: a [batch, feat] feature matrix.
    # D=256 keeps stores lane-dense (multiple of 128); N=128 gives a 2-step grid.
    N, D = 128, 256
    power = 2

    key = jax.random.PRNGKey(0)
    x = jax.random.normal(key, (N, D), dtype=jnp.float32)

    out = jax.block_until_ready(normalize(x, power=power))

    # Pure-JAX reference of the exact PyTorch math.
    ref_norm = jnp.power(
        jnp.sum(jnp.power(x, float(power)), axis=1, keepdims=True), 1.0 / power
    )
    ref = x / ref_norm

    assert out.shape == (N, D)
    assert not jnp.isnan(out).any()
    assert jnp.allclose(out, ref, atol=1e-5, rtol=1e-5), "mismatch vs JAX reference"

    print("KERNEL_OK")
</pallas_src>

<mosaic_0001>
module attributes {stable_mosaic.version = 11 : i64} {
  func.func @_normalize_kernel(%arg0: i32, %arg1: memref<64x256xf32, #tpu.memory_space<vmem>>, %arg2: memref<64x256xf32, #tpu.memory_space<vmem>>) attributes {dimension_semantics = [#tpu.dimension_semantics<parallel>], iteration_bounds = array<i64: 2>, scalar_prefetch = 0 : i64, scratch_operands = 0 : i64, tpu.core_type = #tpu.core_type<tc>, window_params = [{transform_indices = @transform_0, window_bounds = array<i64: 64, 256>}, {transform_indices = @transform_1, window_bounds = array<i64: 64, 256>}]} {
    %c0 = arith.constant 0 : index
    %c0_0 = arith.constant 0 : index
    %0 = vector.load %arg1[%c0, %c0_0] : memref<64x256xf32, #tpu.memory_space<vmem>>, vector<64x256xf32>
    %1 = arith.mulf %0, %0 : vector<64x256xf32>
    %cst = arith.constant dense<0.000000e+00> : vector<64xf32>
    %2 = vector.multi_reduction <add>, %1, %cst [1] : vector<64x256xf32> to vector<64xf32>
    %3 = vector.shape_cast %2 : vector<64xf32> to vector<64x1xf32>
    %4 = math.rsqrt %3 : vector<64x1xf32>
    %5 = vector.broadcast %4 : vector<64x1xf32> to vector<64x256xf32>
    %6 = arith.mulf %0, %5 : vector<64x256xf32>
    %c0_1 = arith.constant 0 : index
    %c0_2 = arith.constant 0 : index
    %7 = vector.load %arg2[%c0_1, %c0_2] : memref<64x256xf32, #tpu.memory_space<vmem>>, vector<64x256xf32>
    tpu.vector_store %arg2[%c0_1, %c0_2], %6 {strides = array<i32>} : memref<64x256xf32, #tpu.memory_space<vmem>>, vector<64x256xf32>,
    return
  }
  func.func @transform_0(%arg0: i32) -> (i32, i32) {
    %c0_i32 = arith.constant 0 : i32
    %c0_i32_0 = arith.constant 0 : i32
    return %arg0, %c0_i32 : i32, i32
  }
  func.func @transform_1(%arg0: i32) -> (i32, i32) {
    %c0_i32 = arith.constant 0 : i32
    %c0_i32_0 = arith.constant 0 : i32
    return %arg0, %c0_i32 : i32, i32
  }
}

</mosaic_0001>

<llo_original>
// kernel: tpu_custom_call.1
$region0: #{tpu_custom_call.1}
  #allocation0 [shape = 'u32[]', space=smem, size = 0x4, offset = 0x4, fixed_abs, tag = 'smem constant byte address 0x4 - core index']
  #allocation1 [shape = 'u32[144,128]{1,0:T(1,128)}', space=vmem, size = 0x12000, scoped, tag = 'internal scratch']
  %s0 = inlined_call_operand.hbm [shape: f32[128,256], index: 0, kind: input, shape index: {}]
  %s1 = inlined_call_operand.hbm [shape: f32[128,256], index: 1, kind: output, shape index: {}]
  %s2 = sld [smem:[#allocation0]]
  $region41: #{tpu_custom_call.1} parent=0
    _
  %s4 = ssub.s32 1, %s2
  %s5 = scalar_select 0, %s4, %s2
  $region1: #{tpu_custom_call.1} parent=0
    #allocation2 [shape = 'u8[131072]{0}', space=vmem, size = 0x20000, scoped, tag = 'input window, operand 0']
    #allocation3 [shape = 's32[2]{0}', space=sflag, size = 0x8, scoped, tag = 'scoped memory for tpu_custom_call.1']
    #allocation4 [shape = 's32[2]{0}', space=sflag, size = 0x8, scoped, tag = 'scoped memory for tpu_custom_call.1']
    #allocation5 [shape = 'u8[131072]{0}', space=vmem, size = 0x20000, scoped, tag = 'output window, operand 0']
    %6 = vsyncpa [#allocation3], 0
    %s7 = scalar_lea.sflag [#allocation3], 1
    %8 = vsyncpa %s7, 0
    %9 = vsyncpa [#allocation4], 0
    %s10 = scalar_lea.sflag [#allocation4], 1
    %11 = vsyncpa %s10, 0
    loop: start=0, step=1, limit=4
    $region2: #{tpu_custom_call.1} parent=1 // loop_pre_header
      _
    $region3: #{tpu_custom_call.1} parent=1 // loop_header
      %s13 = sphi 0, %s17
      %p14 = scmp.ge.s32.totalorder %s13, 4
      %s23 = sphi 0, %s25
      %s26 = sphi 0, %s23
      %s27 = sphi 0, %s26
      %s43 = sphi 0, %s27
      %s49 = sphi 0, %s51
      %s52 = sphi 0, %s49
      %s53 = sphi 0, %s52
      %s69 = sphi 0, %s53
    $region4: #{tpu_custom_call.1} parent=1 // loop_header_branch
      %16 = sbr.rel (%p14) target = $region8
    $region5: #{tpu_custom_call.1} parent=1 // loop_body
      %s18 = ssub.s32 %s13, 1
      %s19 = ssub.s32 %s13, 2
      %s20 = sadd.s32 %s13, 1
      %s21 = ssub.s32 %s13, %s20
      %p22 = scmp.eq.s32.totalorder %s21, 0
      %s24 = sadd.s32 %s23, 1
      %s25 = scalar_select %p22, %s23, %s24
      %p28 = pneg %p22
      %p29 = scmp.eq.s32.totalorder %s13, 1
      %p30 = por %p28, %p29
      %p31 = scmp.ne.s32.totalorder %s23, %s26
      %p32 = scmp.eq.s32.totalorder %s13, 0
      %p33 = por %p31, %p32
      %p34 = scmp.ne.s32.totalorder %s23, %s26
      %p35 = scmp.eq.s32.totalorder %s18, 1
      %p36 = por %p34, %p35
      %p37 = scmp.ne.s32.totalorder %s26, %s27
      %p38 = scmp.eq.s32.totalorder %s18, 0
      %p39 = por %p37, %p38
      %p40 = scmp.ne.s32.totalorder %s26, %s27
      %p41 = scmp.eq.s32.totalorder %s19, 1
      %p42 = por %p40, %p41
      %p44 = scmp.ne.s32.totalorder %s27, %s43
      %p45 = scmp.eq.s32.totalorder %s19, 0
      %p46 = por %p44, %p45
      %s47 = ssub.s32 %s13, %s20
      %p48 = scmp.eq.s32.totalorder %s47, 0
      %s50 = sadd.s32 %s49, 1
      %s51 = scalar_select %p48, %s49, %s50
      %p54 = pneg %p48
      %p55 = scmp.eq.s32.totalorder %s13, 1
      %p56 = por %p54, %p55
      %p57 = scmp.ne.s32.totalorder %s49, %s52
      %p58 = scmp.eq.s32.totalorder %s13, 0
      %p59 = por %p57, %p58
      %p60 = scmp.ne.s32.totalorder %s49, %s52
      %p61 = scmp.eq.s32.totalorder %s18, 1
      %p62 = por %p60, %p61
      %p63 = scmp.ne.s32.totalorder %s52, %s53
      %p64 = scmp.eq.s32.totalorder %s18, 0
      %p65 = por %p63, %p64
      %p66 = scmp.ne.s32.totalorder %s52, %s53
      %p67 = scmp.eq.s32.totalorder %s19, 1
      %p68 = por %p66, %p67
      %p70 = scmp.ne.s32.totalorder %s53, %s69
      %p71 = scmp.eq.s32.totalorder %s19, 0
      %p72 = por %p70, %p71
      %p73 = scmp.le.s32.totalorder 1, %s13
      %p74 = scmp.lt.s32.totalorder %s13, 3
      %p75 = pnand %p73, %p74
      %p76 = pneg %p75
      // Predicated region
      $region9: #{tpu_custom_call.1} parent=5 // pred_check
        _
      $region10: #{tpu_custom_call.1} parent=5 // pred_check_branch
        %78 = sbr.rel (%p75) target = $region12
      $region11: #{tpu_custom_call.1} parent=5 // pred_region
        %s79 = ssub.s32 %s13, 1
      $region12: #{tpu_custom_call.1} parent=5 // pred_fallthru
        _
      %p80 = scmp.lt.s32.totalorder %s13, 2
      // Predicated region
      $region13: #{tpu_custom_call.1} parent=5 // pred_check
        %p81 = pneg %p80
      $region14: #{tpu_custom_call.1} parent=5 // pred_check_branch
        %83 = sbr.rel (%p81) target = $region16
      $region15: #{tpu_custom_call.1} parent=5 // pred_region
        // Predicated region
        $region17: #{tpu_custom_call.1} parent=15 // pred_check
          %p84 = pneg %p33
        $region18: #{tpu_custom_call.1} parent=15 // pred_check_branch
          %86 = sbr.rel (%p84) target = $region20
        $region19: #{tpu_custom_call.1} parent=15 // pred_region
          %s87 = sand.u32 %s23, 1
          %s88 = scalar_lea.sflag [#allocation3], %s87
          %s89 = sand.u32 %s23, 1
          %s90 = smul.addr %s89, 128
          %s91 = scalar_lea.vmem [#allocation2], %s90
          %s92 = smul.u32 8, %s13
          %s94 = ssub.s32 2048, 2048
          %95 = vsyncadd %s88, %s94
          %s96 = smul.addr %s92, 2
          %s97 = smul.addr %s96, 128
          %s98 = scalar_lea.hbm %s0, %s97
          %s99 = sshll.u32 %s91, 4
          %s100 = int_to_ptr.vmem [resolvable:$true] %s99
          %105 = dma.hbm_to_vmem [thread:$0]  %s98, 2048, %s100, %s88, 256, 256, 16
        $region20: #{tpu_custom_call.1} parent=15 // pred_fallthru
          _
      $region16: #{tpu_custom_call.1} parent=5 // pred_fallthru
        _
      %p106 = scmp.le.s32.totalorder 1, %s13
      %p107 = scmp.lt.s32.totalorder %s13, 3
      %p108 = pnand %p106, %p107
      %p109 = pneg %p108
      // Predicated region
      $region21: #{tpu_custom_call.1} parent=5 // pred_check
        _
      $region22: #{tpu_custom_call.1} parent=5 // pred_check_branch
        %111 = sbr.rel (%p108) target = $region24
      $region23: #{tpu_custom_call.1} parent=5 // pred_region
        %s112 = ssub.s32 %s13, 1
        %s113 = sand.u32 %s26, 1
        %s114 = scalar_lea.sflag [#allocation3], %s113
        %s115 = sand.u32 %s26, 1
        %s116 = smul.addr %s115, 128
        %s117 = scalar_lea.vmem [#allocation2], %s116
        // Predicated region
        $region25: #{tpu_custom_call.1} parent=23 // pred_check
          %p118 = pneg %p39
        $region26: #{tpu_custom_call.1} parent=23 // pred_check_branch
          %120 = sbr.rel (%p118) target = $region28
        $region27: #{tpu_custom_call.1} parent=23 // pred_region
          %121 = dma.done %s114, 2048
        $region28: #{tpu_custom_call.1} parent=23 // pred_fallthru
          _
        %s122 = sand.u32 %s26, 1
        %s123 = scalar_lea.sflag [#allocation3], %s122
        %s124 = sand.u32 %s26, 1
        %s125 = smul.addr %s124, 128
        %s126 = scalar_lea.vmem [#allocation2], %s125
        %p127 = pneg %p39
        %p128 = pneg %p36
        %p129 = pneg %p65
        %p130 = pneg %p62
        %s131 = sand.u32 %s52, 1
        %s132 = scalar_lea.sflag [#allocation4], %s131
        %s133 = sand.u32 %s52, 1
        %s134 = smul.addr %s133, 128
        %s135 = scalar_lea.vmem [#allocation5], %s134
        %s136 = smul.u32 8, %s18
        %s137 = smul.u32 8, %s18
        %v138 = vld [vmem:[%s117] sm:$0xff]
        %v139 = vld [vmem:[%s117 + $0x8] sm:$0xff]
        %v140 = vld [vmem:[%s117 + $0x10] sm:$0xff]
        %v141 = vld [vmem:[%s117 + $0x18] sm:$0xff]
        %v142 = vld [vmem:[%s117 + $0x20] sm:$0xff]
        %v143 = vld [vmem:[%s117 + $0x28] sm:$0xff]
        %v144 = vld [vmem:[%s117 + $0x30] sm:$0xff]
        %v145 = vld [vmem:[%s117 + $0x38] sm:$0xff]
        %v146 = vld [vmem:[%s117 + $0x40] sm:$0xff]
        %v147 = vld [vmem:[%s117 + $0x48] sm:$0xff]
        %v148 = vld [vmem:[%s117 + $0x50] sm:$0xff]
        %v149 = vld [vmem:[%s117 + $0x58] sm:$0xff]
        %v150 = vld [vmem:[%s117 + $0x60] sm:$0xff]
        %v151 = vld [vmem:[%s117 + $0x68] sm:$0xff]
        %v152 = vld [vmem:[%s117 + $0x70] sm:$0xff]
        %v153 = vld [vmem:[%s117 + $0x78] sm:$0xff]
        %v154 = vmul.f32 %v138, %v138
        %v155 = vmul.f32 %v139, %v139
        %v156 = vmul.f32 %v140, %v140
        %v157 = vmul.f32 %v141, %v141
        %v158 = vmul.f32 %v142, %v142
        %v159 = vmul.f32 %v143, %v143
        %v160 = vmul.f32 %v144, %v144
        %v161 = vmul.f32 %v145, %v145
        %v162 = vmul.f32 %v146, %v146
        %v163 = vmul.f32 %v147, %v147
        %v164 = vmul.f32 %v148, %v148
        %v165 = vmul.f32 %v149, %v149
        %v166 = vmul.f32 %v150, %v150
        %v167 = vmul.f32 %v151, %v151
        %v168 = vmul.f32 %v152, %v152
        %v169 = vmul.f32 %v153, %v153
        %v170 = vadd.f32 %v154, %v155
        %171 = vadd.xlane.f32.xlu0 %v170
        %v172 = vpop.xlane.xlu0 %171
        %v173 = vadd.f32 %v156, %v157
        %174 = vadd.xlane.f32.xlu0 %v173
        %v175 = vpop.xlane.xlu0 %174
        %v176 = vadd.f32 %v158, %v159
        %177 = vadd.xlane.f32.xlu0 %v176
        %v178 = vpop.xlane.xlu0 %177
        %v179 = vadd.f32 %v160, %v161
        %180 = vadd.xlane.f32.xlu0 %v179
        %v181 = vpop.xlane.xlu0 %180
        %v182 = vadd.f32 %v162, %v163
        %183 = vadd.xlane.f32.xlu0 %v182
        %v184 = vpop.xlane.xlu0 %183
        %v185 = vadd.f32 %v164, %v165
        %186 = vadd.xlane.f32.xlu0 %v185
        %v187 = vpop.xlane.xlu0 %186
        %v188 = vadd.f32 %v166, %v167
        %189 = vadd.xlane.f32.xlu0 %v188
        %v190 = vpop.xlane.xlu0 %189
        %v191 = vadd.f32 %v168, %v169
        %192 = vadd.xlane.f32.xlu0 %v191
        %v193 = vpop.xlane.xlu0 %192
        %v194 = vrsqrt.pop %v172
        %v195 = vrsqrt.pop %v175
        %v196 = vrsqrt.pop %v178
        %v197 = vrsqrt.pop %v181
        %v198 = vrsqrt.pop %v184
        %v199 = vrsqrt.pop %v187
        %v200 = vrsqrt.pop %v190
        %v201 = vrsqrt.pop %v193
        %v202 = vmul.f32 %v138, %v194
        %v203 = vmul.f32 %v139, %v194
        %v204 = vmul.f32 %v140, %v195
        %v205 = vmul.f32 %v141, %v195
        %v206 = vmul.f32 %v142, %v196
        %v207 = vmul.f32 %v143, %v196
        %v208 = vmul.f32 %v144, %v197
        %v209 = vmul.f32 %v145, %v197
        %v210 = vmul.f32 %v146, %v198
        %v211 = vmul.f32 %v147, %v198
        %v212 = vmul.f32 %v148, %v199
        %v213 = vmul.f32 %v149, %v199
        %v214 = vmul.f32 %v150, %v200
        %v215 = vmul.f32 %v151, %v200
        %v216 = vmul.f32 %v152, %v201
        %v217 = vmul.f32 %v153, %v201
        %218 = vst [vmem:[%s135] sm:$0xff] %v202
        %219 = vst [vmem:[%s135 + $0x8] sm:$0xff] %v203
        %220 = vst [vmem:[%s135 + $0x10] sm:$0xff] %v204
        %221 = vst [vmem:[%s135 + $0x18] sm:$0xff] %v205
        %222 = vst [vmem:[%s135 + $0x20] sm:$0xff] %v206
        %223 = vst [vmem:[%s135 + $0x28] sm:$0xff] %v207
        %224 = vst [vmem:[%s135 + $0x30] sm:$0xff] %v208
        %225 = vst [vmem:[%s135 + $0x38] sm:$0xff] %v209
        %226 = vst [vmem:[%s135 + $0x40] sm:$0xff] %v210
        %227 = vst [vmem:[%s135 + $0x48] sm:$0xff] %v211
        %228 = vst [vmem:[%s135 + $0x50] sm:$0xff] %v212
        %229 = vst [vmem:[%s135 + $0x58] sm:$0xff] %v213
        %230 = vst [vmem:[%s135 + $0x60] sm:$0xff] %v214
        %231 = vst [vmem:[%s135 + $0x68] sm:$0xff] %v215
        %232 = vst [vmem:[%s135 + $0x70] sm:$0xff] %v216
        %233 = vst [vmem:[%s135 + $0x78] sm:$0xff] %v217
        %s234 = sand.u32 %s52, 1
        %s235 = scalar_lea.sflag [#allocation4], %s234
        %s236 = sand.u32 %s52, 1
        %s237 = smul.addr %s236, 128
        %s238 = scalar_lea.vmem [#allocation5], %s237
        // Predicated region
        $region29: #{tpu_custom_call.1} parent=23 // pred_check
          %p239 = pneg %p62
        $region30: #{tpu_custom_call.1} parent=23 // pred_check_branch
          %241 = sbr.rel (%p239) target = $region32
        $region31: #{tpu_custom_call.1} parent=23 // pred_region
          %s242 = smul.u32 8, %s18
          %s244 = ssub.s32 2048, 2048
          %245 = vsyncadd %s235, %s244
          %s246 = smul.addr %s242, 2
          %s247 = smul.addr %s246, 128
          %s248 = scalar_lea.hbm %s1, %s247
          %s249 = sshll.u32 %s238, 4
          %s250 = int_to_ptr.vmem [resolvable:$true] %s249
          %255 = dma.vmem_to_hbm [thread:$0]  %s250, 2048, %s248, %s235, 256, 256, 16
        $region32: #{tpu_custom_call.1} parent=23 // pred_fallthru
          _
      $region24: #{tpu_custom_call.1} parent=5 // pred_fallthru
        _
      %p256 = scmp.le.s32.totalorder 2, %s13
      // Predicated region
      $region33: #{tpu_custom_call.1} parent=5 // pred_check
        %p257 = pneg %p256
      $region34: #{tpu_custom_call.1} parent=5 // pred_check_branch
        %259 = sbr.rel (%p257) target = $region36
      $region35: #{tpu_custom_call.1} parent=5 // pred_region
        %s260 = ssub.s32 %s13, 2
        // Predicated region
        $region37: #{tpu_custom_call.1} parent=35 // pred_check
          %p261 = pneg %p68
        $region38: #{tpu_custom_call.1} parent=35 // pred_check_branch
          %263 = sbr.rel (%p261) target = $region40
        $region39: #{tpu_custom_call.1} parent=35 // pred_region
          %s264 = sand.u32 %s53, 1
          %s265 = scalar_lea.sflag [#allocation4], %s264
          %s266 = sand.u32 %s53, 1
          %s267 = smul.addr %s266, 128
          %s268 = scalar_lea.vmem [#allocation5], %s267
          %269 = dma.done %s265, 2048
        $region40: #{tpu_custom_call.1} parent=35 // pred_fallthru
          _
      $region36: #{tpu_custom_call.1} parent=5 // pred_fallthru
        _
    $region6: #{tpu_custom_call.1} parent=1 // loop_footer
      %s17 = sadd.s32 1, %s13
    $region7: #{tpu_custom_call.1} parent=1 // loop_footer_branch
      %12 = sbr.rel target = $region3
    $region8: #{tpu_custom_call.1} parent=1 // loop_exit
      _
    %270 = vsyncpa [#allocation3], 1
    %s271 = scalar_lea.sflag [#allocation3], 1
    %272 = vsyncpa %s271, 1
    %273 = vsyncpa [#allocation4], 1
    %s274 = scalar_lea.sflag [#allocation4], 1
    %275 = vsyncpa %s274, 1

</llo_original>
